<compile_context>
chip_gen: v7x
topology: tpu7x:2x2x1
jax: 0.10.0
libtpu: 0.0.40
codegen_flags: <defaults>
</compile_context>

<pallas_src>
import functools

import jax
import jax.numpy as jnp
from jax.experimental import pallas as pl
from jax.experimental.pallas import tpu as pltpu

_LANE = 128   # lane tile (last dim)
_SUB = 8      # f32 sublane tile (second-to-last dim)
_MAX_TN = 2048  # tiles >= 512 lanes already reach ~85%+ of HBM roofline


def _round_up(x, m):
    return (x + m - 1) // m * m


def _vmem_budget():
    """Returns (tile budget for the double-buffered working set, vmem_limit_bytes)."""
    try:
        cap = int(pltpu.get_tpu_info().vmem_capacity_bytes)
    except Exception:
        cap = 64 << 20  # v7x per-TC physical VMEM; conservative everywhere
    # v5e/v6e (128 MiB): limit 96 MiB, budget 48 MiB.  v7x (64 MiB): 48 / 24 MiB.
    limit = max(32 << 20, min(cap * 3 // 4, 96 << 20))
    return limit // 2, limit


# ---------------------------------------------------------------------------
# Kernels
# ---------------------------------------------------------------------------
def _log_softmax_bwd_kernel(g_ref, o_ref, gi_ref):
    # Block (tb, C, tn) (or (tb, C) for the N==1 path): the reduction axis
    # (dim 1) is fully resident, so the sum is a free in-block reduce (XLU)
    # and exp() goes to the EUP -- both off the DMA critical path.
    g = g_ref[...].astype(jnp.float32)
    s = jnp.sum(g, axis=1, keepdims=True)
    gi = g - jnp.exp(o_ref[...].astype(jnp.float32)) * s
    gi_ref[...] = gi.astype(gi_ref.dtype)


def _sum_over_dim1_kernel(g_ref, s_ref, *, c_total, tc):
    # Pass 1 of the large-C fallback: accumulate sum(grad_output, dim=1) over
    # C-tiles into a revisited (tb, 1, tn) output block (grid axis 2 is the
    # reduction axis, marked "arbitrary").
    @pl.when(pl.program_id(2) == 0)
    def _():
        s_ref[...] = jnp.zeros_like(s_ref)

    g = g_ref[...].astype(jnp.float32)
    # Mask sublane rows that fall past C (partial last C-tile reads garbage).
    c0 = pl.program_id(2) * tc
    row = c0 + jax.lax.broadcasted_iota(jnp.int32, g.shape, dimension=1)
    g = jnp.where(row < c_total, g, 0.0)
    s_ref[...] += jnp.sum(g, axis=1, keepdims=True)


def _apply_kernel(g_ref, o_ref, s_ref, gi_ref):
    # Pass 2 of the large-C fallback: elementwise g - exp(o) * s.
    g = g_ref[...].astype(jnp.float32)
    gi = g - jnp.exp(o_ref[...].astype(jnp.float32)) * s_ref[...]
    gi_ref[...] = gi.astype(gi_ref.dtype)


# ---------------------------------------------------------------------------
# Tile selection
# ---------------------------------------------------------------------------
def _pick_c_tiled_tiles(C, N, bpe, budget):
    """Tiles for the two-pass large-C fallback: (tb, tc, tn)."""
    if N < _LANE:
        tn = N                       # last dim == full array dim (stores masked)
        tn_pad = _round_up(N, _LANE)
    else:
        tn = min((N // _LANE) * _LANE, 4 * _LANE)
        tn_pad = tn
    cap_tc = budget // (bpe * tn_pad)
    if C >= _SUB:
        tc = min(max(_SUB, cap_tc // _SUB * _SUB), (C // _SUB) * _SUB)
    else:
        tc = C
    return 1, tc, tn


# ---------------------------------------------------------------------------
# Wrapper
# ---------------------------------------------------------------------------
def log_softmax_backward(grad_output, output, *, _force_c_tiled=False):
    """grad of log_softmax w.r.t. its input, reduction over dim=1 of [B, C, N]."""
    assert grad_output.shape == output.shape and grad_output.ndim == 3
    B, C, N = grad_output.shape
    out_dtype = grad_output.dtype

    budget, vmem_limit = _vmem_budget()
    in_bytes = grad_output.dtype.itemsize + output.dtype.itemsize
    out_bytes = jnp.dtype(out_dtype).itemsize
    # Per block element: 2 pipeline buffers x (2 input streams + 1 output stream).
    bpe = 2 * (in_bytes + out_bytes)

    cost = pl.CostEstimate(
        flops=3 * B * C * N,
        transcendentals=B * C * N,
        bytes_accessed=B * C * N * (in_bytes + out_bytes),
    )
    c_pad = _round_up(C, _SUB)

    # ---- Path A: classic logits layout (N == 1) -> put C on the lane axis. ----
    if (N == 1 and not _force_c_tiled
            and bpe * _SUB * _round_up(C, _LANE) <= budget):
        g2 = grad_output.reshape(B, C)
        o2 = output.reshape(B, C)
        c_lane = _round_up(C, _LANE)
        cap_tb = budget // (bpe * c_lane)
        if cap_tb >= B:
            tb = B                                   # block dim == full array dim
        else:
            tb = max(_SUB, cap_tb // _SUB * _SUB)    # multiple-of-8 sublane tile
        if pl.cdiv(B, tb) == 1 and B > _SUB:
            tb = _round_up(pl.cdiv(B, 2), _SUB)      # give both v7x TCs a block
        spec = pl.BlockSpec((tb, C), lambda b: (b, 0))
        out = pl.pallas_call(
            _log_softmax_bwd_kernel,
            out_shape=jax.ShapeDtypeStruct((B, C), out_dtype),
            grid_spec=pl.GridSpec(grid=(pl.cdiv(B, tb),),
                                  in_specs=[spec, spec], out_specs=spec),
            compiler_params=pltpu.CompilerParams(
                dimension_semantics=("parallel",),
                vmem_limit_bytes=vmem_limit),
            cost_estimate=cost,
        )(g2, o2)
        return out.reshape(B, C, N)

    # ---- Path B: main path, C fully resident in every block. ----
    main_fits = bpe * c_pad * _LANE <= budget
    if main_fits and not _force_c_tiled:
        if N < _LANE:
            tn = N                                   # last dim == full array dim
            tn_pad = _LANE
        else:
            cap = budget // (bpe * c_pad)
            tn = max(_LANE, min(_MAX_TN, (N // _LANE) * _LANE,
                                cap // _LANE * _LANE))
            tn_pad = tn
        tb = max(1, min(B, budget // (bpe * c_pad * tn_pad)))

        nb, nn = pl.cdiv(B, tb), pl.cdiv(N, tn)
        if nb * nn == 1:                             # keep both v7x TCs busy
            if tn >= 2 * _LANE:
                tn = _round_up(tn // 2, _LANE)
                nn = pl.cdiv(N, tn)
            elif tb >= 2:
                tb = pl.cdiv(tb, 2)
                nb = pl.cdiv(B, tb)

        # TODO(synk): when tn is forced down to 128-256 by huge C, sweep
        # pipeline_mode=pl.Buffered(3) on the input specs (small strided DMAs).
        spec = pl.BlockSpec((tb, C, tn), lambda b, n: (b, 0, n))
        return pl.pallas_call(
            _log_softmax_bwd_kernel,
            out_shape=jax.ShapeDtypeStruct((B, C, N), out_dtype),
            grid_spec=pl.GridSpec(grid=(nb, nn),
                                  in_specs=[spec, spec], out_specs=spec),
            compiler_params=pltpu.CompilerParams(
                dimension_semantics=("parallel", "parallel"),
                vmem_limit_bytes=vmem_limit),
            cost_estimate=cost,
        )(grad_output, output)

    # ---- Path C: C too large for a resident block -> two-pass, C-tiled. ----
    tb, tc, tn = _pick_c_tiled_tiles(C, N, bpe, budget)
    if _force_c_tiled:
        tc = min(tc, _SUB)          # exercise multi-step accumulation in tests
    nb, nn, nc = pl.cdiv(B, tb), pl.cdiv(N, tn), pl.cdiv(C, tc)

    g_spec = pl.BlockSpec((tb, tc, tn), lambda b, n, c: (b, c, n))
    s_spec = pl.BlockSpec((tb, 1, tn), lambda b, n, c: (b, 0, n))

    sums = pl.pallas_call(
        functools.partial(_sum_over_dim1_kernel, c_total=C, tc=tc),
        out_shape=jax.ShapeDtypeStruct((B, 1, N), jnp.float32),
        grid_spec=pl.GridSpec(grid=(nb, nn, nc),
                              in_specs=[g_spec], out_specs=s_spec),
        compiler_params=pltpu.CompilerParams(
            dimension_semantics=("parallel", "parallel", "arbitrary"),
            vmem_limit_bytes=vmem_limit),
        cost_estimate=pl.CostEstimate(
            flops=B * C * N, transcendentals=0,
            bytes_accessed=B * C * N * grad_output.dtype.itemsize + B * N * 4),
    )(grad_output)

    return pl.pallas_call(
        _apply_kernel,
        out_shape=jax.ShapeDtypeStruct((B, C, N), out_dtype),
        grid_spec=pl.GridSpec(grid=(nb, nn, nc),
                              in_specs=[g_spec, g_spec, s_spec],
                              out_specs=g_spec),
        compiler_params=pltpu.CompilerParams(
            dimension_semantics=("parallel", "parallel", "arbitrary"),
            vmem_limit_bytes=vmem_limit),
        cost_estimate=cost,
    )(grad_output, output, sums)


def _reference(grad_output, output):
    return grad_output - jnp.exp(output) * jnp.sum(grad_output, axis=1, keepdims=True)


if __name__ == "__main__":
    key = jax.random.PRNGKey(0)

    def _case(key, shape, **kw):
        k1, k2 = jax.random.split(key)
        logits = jax.random.normal(k1, shape, dtype=jnp.float32)
        output = jax.nn.log_softmax(logits, axis=1)
        grad_output = jax.random.normal(k2, shape, dtype=jnp.float32)
        ref = _reference(grad_output, output)
        got = jax.block_until_ready(log_softmax_backward(grad_output, output, **kw))
        assert got.shape == shape and got.dtype == jnp.float32
        assert jnp.allclose(got, ref, atol=1e-5, rtol=1e-5)

    k1, k2, k3 = jax.random.split(key, 3)
    # Main path (shape consistent with the module's 3-D float32 spec).
    _case(k1, (2, 4, 16))
    # N == 1 "classic logits" lane-major path.
    _case(k2, (2, 10, 1))
    # C-tiled two-pass fallback (forced so the small test exercises it).
    _case(k3, (2, 20, 16), _force_c_tiled=True)

    print("KERNEL_OK")
</pallas_src>

<mosaic_0001>
module attributes {stable_mosaic.version = 11 : i64} {
  func.func @_log_softmax_bwd_kernel(%arg0: i32, %arg1: i32, %arg2: memref<1x4x16xf32, #tpu.memory_space<vmem>>, %arg3: memref<1x4x16xf32, #tpu.memory_space<vmem>>, %arg4: memref<1x4x16xf32, #tpu.memory_space<vmem>>) attributes {dimension_semantics = [#tpu.dimension_semantics<parallel>, #tpu.dimension_semantics<parallel>], iteration_bounds = array<i64: 2, 1>, scalar_prefetch = 0 : i64, scratch_operands = 0 : i64, tpu.core_type = #tpu.core_type<tc>, window_params = [{transform_indices = @transform_0, window_bounds = array<i64: 1, 4, 16>}, {transform_indices = @transform_1, window_bounds = array<i64: 1, 4, 16>}, {transform_indices = @transform_2, window_bounds = array<i64: 1, 4, 16>}]} {
    %c0 = arith.constant 0 : index
    %c0_0 = arith.constant 0 : index
    %c0_1 = arith.constant 0 : index
    %0 = vector.load %arg2[%c0, %c0_0, %c0_1] : memref<1x4x16xf32, #tpu.memory_space<vmem>>, vector<1x4x16xf32>
    %cst = arith.constant dense<0.000000e+00> : vector<1x16xf32>
    %1 = vector.multi_reduction <add>, %0, %cst [1] : vector<1x4x16xf32> to vector<1x16xf32>
    %2 = vector.shape_cast %1 : vector<1x16xf32> to vector<1x1x16xf32>
    %c0_2 = arith.constant 0 : index
    %c0_3 = arith.constant 0 : index
    %c0_4 = arith.constant 0 : index
    %3 = vector.load %arg3[%c0_2, %c0_3, %c0_4] : memref<1x4x16xf32, #tpu.memory_space<vmem>>, vector<1x4x16xf32>
    %4 = math.exp %3 : vector<1x4x16xf32>
    %5 = vector.broadcast %2 : vector<1x1x16xf32> to vector<1x4x16xf32>
    %6 = arith.mulf %4, %5 : vector<1x4x16xf32>
    %7 = arith.subf %0, %6 : vector<1x4x16xf32>
    %c0_5 = arith.constant 0 : index
    %c0_6 = arith.constant 0 : index
    %c0_7 = arith.constant 0 : index
    %8 = vector.load %arg4[%c0_5, %c0_6, %c0_7] : memref<1x4x16xf32, #tpu.memory_space<vmem>>, vector<1x4x16xf32>
    tpu.vector_store %arg4[%c0_5, %c0_6, %c0_7], %7 {strides = array<i32>} : memref<1x4x16xf32, #tpu.memory_space<vmem>>, vector<1x4x16xf32>,
    return
  }
  func.func @transform_0(%arg0: i32, %arg1: i32) -> (i32, i32, i32) {
    %c0_i32 = arith.constant 0 : i32
    %c0_i32_0 = arith.constant 0 : i32
    return %arg0, %c0_i32, %arg1 : i32, i32, i32
  }
  func.func @transform_1(%arg0: i32, %arg1: i32) -> (i32, i32, i32) {
    %c0_i32 = arith.constant 0 : i32
    %c0_i32_0 = arith.constant 0 : i32
    return %arg0, %c0_i32, %arg1 : i32, i32, i32
  }
  func.func @transform_2(%arg0: i32, %arg1: i32) -> (i32, i32, i32) {
    %c0_i32 = arith.constant 0 : i32
    %c0_i32_0 = arith.constant 0 : i32
    return %arg0, %c0_i32, %arg1 : i32, i32, i32
  }
}

</mosaic_0001>

<llo_original>
// kernel: tpu_custom_call.1
$region0: #{tpu_custom_call.1}
  #allocation0 [shape = 'u32[]', space=smem, size = 0x4, offset = 0x4, fixed_abs, tag = 'smem constant byte address 0x4 - core index']
  #allocation1 [shape = 'u32[144,128]{1,0:T(1,128)}', space=vmem, size = 0x12000, scoped, tag = 'internal scratch']
  %s0 = inlined_call_operand.hbm [shape: f32[2,4,16], index: 0, kind: input, shape index: {}]
  %s1 = inlined_call_operand.hbm [shape: f32[2,4,16], index: 1, kind: input, shape index: {}]
  %s2 = inlined_call_operand.hbm [shape: f32[2,4,16], index: 2, kind: output, shape index: {}]
  %s3 = sld [smem:[#allocation0]]
  $region49: #{tpu_custom_call.1} parent=0
    _
  %s5 = ssub.s32 1, %s3
  %s6 = scalar_select 0, %s5, %s3
  $region1: #{tpu_custom_call.1} parent=0
    #allocation2 [shape = 'u8[4096]{0}', space=vmem, size = 0x1000, scoped, tag = 'input window, operand 0']
    #allocation3 [shape = 's32[2]{0}', space=sflag, size = 0x8, scoped, tag = 'scoped memory for tpu_custom_call.1']
    #allocation4 [shape = 's32[2]{0}', space=sflag, size = 0x8, scoped, tag = 'scoped memory for tpu_custom_call.1']
    #allocation5 [shape = 'u8[4096]{0}', space=vmem, size = 0x1000, scoped, tag = 'input window, operand 1']
    #allocation6 [shape = 's32[2]{0}', space=sflag, size = 0x8, scoped, tag = 'scoped memory for tpu_custom_call.1']
    #allocation7 [shape = 'u8[4096]{0}', space=vmem, size = 0x1000, scoped, tag = 'output window, operand 0']
    %7 = vsyncpa [#allocation3], 0
    %s8 = scalar_lea.sflag [#allocation3], 1
    %9 = vsyncpa %s8, 0
    %10 = vsyncpa [#allocation6], 0
    %s11 = scalar_lea.sflag [#allocation6], 1
    %12 = vsyncpa %s11, 0
    %13 = vsyncpa [#allocation4], 0
    %s14 = scalar_lea.sflag [#allocation4], 1
    %15 = vsyncpa %s14, 0
    loop: start=0, step=1, limit=4
    $region2: #{tpu_custom_call.1} parent=1 // loop_pre_header
      _
    $region3: #{tpu_custom_call.1} parent=1 // loop_header
      %s17 = sphi 0, %s21
      %p18 = scmp.ge.s32.totalorder %s17, 4
      %s24 = sphi 0, %s36
      %s25 = sphi 0, %s32
      %s26 = sphi 0, %s24
      %s27 = sphi 0, %s25
      %s28 = sphi 0, %s26
      %s29 = sphi 0, %s27
      %s41 = sphi 0, %s43
      %s44 = sphi 0, %s41
      %s45 = sphi 0, %s44
      %s61 = sphi 0, %s45
      %s69 = sphi 0, %s71
      %s72 = sphi 0, %s69
      %s73 = sphi 0, %s72
      %s89 = sphi 0, %s73
      %s97 = sphi 0, %s99
      %s100 = sphi 0, %s97
      %s101 = sphi 0, %s100
      %s117 = sphi 0, %s101
    $region4: #{tpu_custom_call.1} parent=1 // loop_header_branch
      %20 = sbr.rel (%p18) target = $region8
    $region5: #{tpu_custom_call.1} parent=1 // loop_body
      %s22 = ssub.s32 %s17, 1
      %s23 = ssub.s32 %s17, 2
      %s30 = sadd.s32 1, %s25
      %p31 = scmp.ge.s32.totalorder %s30, 1
      %s32 = scalar_select %p31, 0, %s30
      %s33 = sadd.s32 1, %s24
      %s34 = scalar_select %p31, %s33, %s24
      %p35 = scmp.ge.s32.totalorder %s34, 2
      %s36 = scalar_select %p35, 0, %s34
      %s37 = ssub.s32 %s24, %s36
      %s38 = ssub.s32 %s25, %s32
      %s39 = sor.u32 %s37, %s38
      %p40 = scmp.eq.s32.totalorder %s39, 0
      %s42 = sadd.s32 %s41, 1
      %s43 = scalar_select %p40, %s41, %s42
      %p46 = pneg %p40
      %p47 = scmp.eq.s32.totalorder %s17, 1
      %p48 = por %p46, %p47
      %p49 = scmp.ne.s32.totalorder %s41, %s44
      %p50 = scmp.eq.s32.totalorder %s17, 0
      %p51 = por %p49, %p50
      %p52 = scmp.ne.s32.totalorder %s41, %s44
      %p53 = scmp.eq.s32.totalorder %s22, 1
      %p54 = por %p52, %p53
      %p55 = scmp.ne.s32.totalorder %s44, %s45
      %p56 = scmp.eq.s32.totalorder %s22, 0
      %p57 = por %p55, %p56
      %p58 = scmp.ne.s32.totalorder %s44, %s45
      %p59 = scmp.eq.s32.totalorder %s23, 1
      %p60 = por %p58, %p59
      %p62 = scmp.ne.s32.totalorder %s45, %s61
      %p63 = scmp.eq.s32.totalorder %s23, 0
      %p64 = por %p62, %p63
      %s65 = ssub.s32 %s24, %s36
      %s66 = ssub.s32 %s25, %s32
      %s67 = sor.u32 %s65, %s66
      %p68 = scmp.eq.s32.totalorder %s67, 0
      %s70 = sadd.s32 %s69, 1
      %s71 = scalar_select %p68, %s69, %s70
      %p74 = pneg %p68
      %p75 = scmp.eq.s32.totalorder %s17, 1
      %p76 = por %p74, %p75
      %p77 = scmp.ne.s32.totalorder %s69, %s72
      %p78 = scmp.eq.s32.totalorder %s17, 0
      %p79 = por %p77, %p78
      %p80 = scmp.ne.s32.totalorder %s69, %s72
      %p81 = scmp.eq.s32.totalorder %s22, 1
      %p82 = por %p80, %p81
      %p83 = scmp.ne.s32.totalorder %s72, %s73
      %p84 = scmp.eq.s32.totalorder %s22, 0
      %p85 = por %p83, %p84
      %p86 = scmp.ne.s32.totalorder %s72, %s73
      %p87 = scmp.eq.s32.totalorder %s23, 1
      %p88 = por %p86, %p87
      %p90 = scmp.ne.s32.totalorder %s73, %s89
      %p91 = scmp.eq.s32.totalorder %s23, 0
      %p92 = por %p90, %p91
      %s93 = ssub.s32 %s24, %s36
      %s94 = ssub.s32 %s25, %s32
      %s95 = sor.u32 %s93, %s94
      %p96 = scmp.eq.s32.totalorder %s95, 0
      %s98 = sadd.s32 %s97, 1
      %s99 = scalar_select %p96, %s97, %s98
      %p102 = pneg %p96
      %p103 = scmp.eq.s32.totalorder %s17, 1
      %p104 = por %p102, %p103
      %p105 = scmp.ne.s32.totalorder %s97, %s100
      %p106 = scmp.eq.s32.totalorder %s17, 0
      %p107 = por %p105, %p106
      %p108 = scmp.ne.s32.totalorder %s97, %s100
      %p109 = scmp.eq.s32.totalorder %s22, 1
      %p110 = por %p108, %p109
      %p111 = scmp.ne.s32.totalorder %s100, %s101
      %p112 = scmp.eq.s32.totalorder %s22, 0
      %p113 = por %p111, %p112
      %p114 = scmp.ne.s32.totalorder %s100, %s101
      %p115 = scmp.eq.s32.totalorder %s23, 1
      %p116 = por %p114, %p115
      %p118 = scmp.ne.s32.totalorder %s101, %s117
      %p119 = scmp.eq.s32.totalorder %s23, 0
      %p120 = por %p118, %p119
      %p121 = scmp.le.s32.totalorder 1, %s17
      %p122 = scmp.lt.s32.totalorder %s17, 3
      %p123 = pnand %p121, %p122
      %p124 = pneg %p123
      // Predicated region
      $region9: #{tpu_custom_call.1} parent=5 // pred_check
        _
      $region10: #{tpu_custom_call.1} parent=5 // pred_check_branch
        %126 = sbr.rel (%p123) target = $region12
      $region11: #{tpu_custom_call.1} parent=5 // pred_region
        %s127 = ssub.s32 %s17, 1
      $region12: #{tpu_custom_call.1} parent=5 // pred_fallthru
        _
      %p128 = scmp.lt.s32.totalorder %s17, 2
      // Predicated region
      $region13: #{tpu_custom_call.1} parent=5 // pred_check
        %p129 = pneg %p128
      $region14: #{tpu_custom_call.1} parent=5 // pred_check_branch
        %131 = sbr.rel (%p129) target = $region16
      $region15: #{tpu_custom_call.1} parent=5 // pred_region
        // Predicated region
        $region17: #{tpu_custom_call.1} parent=15 // pred_check
          %p132 = pneg %p51
        $region18: #{tpu_custom_call.1} parent=15 // pred_check_branch
          %134 = sbr.rel (%p132) target = $region20
        $region19: #{tpu_custom_call.1} parent=15 // pred_region
          %s135 = sand.u32 %s41, 1
          %s136 = scalar_lea.sflag [#allocation3], %s135
          %s137 = sand.u32 %s41, 1
          %s138 = smul.addr %s137, 4
          %s139 = scalar_lea.vmem [#allocation2], %s138
          %s141 = ssub.s32 64, 64
          %142 = vsyncadd %s136, %s141
          %s143 = sadd.s32 %s25, %s24
          %s144 = smul.addr %s143, 64
          %s145 = scalar_lea.hbm %s0, %s144
          %s147 = sshll.u32 %s139, 4
          %s148 = int_to_ptr.vmem [resolvable:$true] %s147
          %150 = dma.hbm_to_vmem [thread:$0]  %s145, 64, %s148, %s136
        $region20: #{tpu_custom_call.1} parent=15 // pred_fallthru
          _
        // Predicated region
        $region21: #{tpu_custom_call.1} parent=15 // pred_check
          %p151 = pneg %p79
        $region22: #{tpu_custom_call.1} parent=15 // pred_check_branch
          %153 = sbr.rel (%p151) target = $region24
        $region23: #{tpu_custom_call.1} parent=15 // pred_region
          %s154 = sand.u32 %s69, 1
          %s155 = scalar_lea.sflag [#allocation6], %s154
          %s156 = sand.u32 %s69, 1
          %s157 = smul.addr %s156, 4
          %s158 = scalar_lea.vmem [#allocation5], %s157
          %s160 = ssub.s32 64, 64
          %161 = vsyncadd %s155, %s160
          %s162 = sadd.s32 %s25, %s24
          %s163 = smul.addr %s162, 64
          %s164 = scalar_lea.hbm %s1, %s163
          %s166 = sshll.u32 %s158, 4
          %s167 = int_to_ptr.vmem [resolvable:$true] %s166
          %169 = dma.hbm_to_vmem [thread:$0]  %s164, 64, %s167, %s155
        $region24: #{tpu_custom_call.1} parent=15 // pred_fallthru
          _
      $region16: #{tpu_custom_call.1} parent=5 // pred_fallthru
        _
      %p170 = scmp.le.s32.totalorder 1, %s17
      %p171 = scmp.lt.s32.totalorder %s17, 3
      %p172 = pnand %p170, %p171
      %p173 = pneg %p172
      // Predicated region
      $region25: #{tpu_custom_call.1} parent=5 // pred_check
        _
      $region26: #{tpu_custom_call.1} parent=5 // pred_check_branch
        %175 = sbr.rel (%p172) target = $region28
      $region27: #{tpu_custom_call.1} parent=5 // pred_region
        %s176 = ssub.s32 %s17, 1
        %s177 = sand.u32 %s44, 1
        %s178 = scalar_lea.sflag [#allocation3], %s177
        %s179 = sand.u32 %s44, 1
        %s180 = smul.addr %s179, 4
        %s181 = scalar_lea.vmem [#allocation2], %s180
        // Predicated region
        $region29: #{tpu_custom_call.1} parent=27 // pred_check
          %p182 = pneg %p57
        $region30: #{tpu_custom_call.1} parent=27 // pred_check_branch
          %184 = sbr.rel (%p182) target = $region32
        $region31: #{tpu_custom_call.1} parent=27 // pred_region
          %185 = dma.done %s178, 64
        $region32: #{tpu_custom_call.1} parent=27 // pred_fallthru
          _
        %s186 = sand.u32 %s72, 1
        %s187 = scalar_lea.sflag [#allocation6], %s186
        %s188 = sand.u32 %s72, 1
        %s189 = smul.addr %s188, 4
        %s190 = scalar_lea.vmem [#allocation5], %s189
        // Predicated region
        $region33: #{tpu_custom_call.1} parent=27 // pred_check
          %p191 = pneg %p85
        $region34: #{tpu_custom_call.1} parent=27 // pred_check_branch
          %193 = sbr.rel (%p191) target = $region36
        $region35: #{tpu_custom_call.1} parent=27 // pred_region
          %194 = dma.done %s187, 64
        $region36: #{tpu_custom_call.1} parent=27 // pred_fallthru
          _
        %s195 = sand.u32 %s44, 1
        %s196 = scalar_lea.sflag [#allocation3], %s195
        %s197 = sand.u32 %s44, 1
        %s198 = smul.addr %s197, 4
        %s199 = scalar_lea.vmem [#allocation2], %s198
        %p200 = pneg %p57
        %p201 = pneg %p54
        %s202 = sand.u32 %s72, 1
        %s203 = scalar_lea.sflag [#allocation6], %s202
        %s204 = sand.u32 %s72, 1
        %s205 = smul.addr %s204, 4
        %s206 = scalar_lea.vmem [#allocation5], %s205
        %p207 = pneg %p85
        %p208 = pneg %p82
        %p209 = pneg %p113
        %p210 = pneg %p110
        %s211 = sand.u32 %s100, 1
        %s212 = scalar_lea.sflag [#allocation4], %s211
        %s213 = sand.u32 %s100, 1
        %s214 = smul.addr %s213, 4
        %s215 = scalar_lea.vmem [#allocation7], %s214
        %v216 = vld [vmem:[%s181] sm:$0xf]
        %vm217 = vcmask 125952
        %v218 = vsel %vm217, %v216, 0.0
        %v219 = vrot.slane %v218, 4
        %v220 = vadd.f32 %v218, %v219
        %v221 = vrot.slane %v220, 2
        %v222 = vadd.f32 %v220, %v221
        %v223 = vrot.slane %v222, 1
        %v224 = vadd.f32 %v222, %v223
        %v225 = vld [vmem:[%s190] sm:$0xf]
        %v226 = vmul.f32 %v225, 1.442695
        %v227 = vpow.pop %v226
        %v228 = vmul.f32 %v227, %v224
        %v229 = vsub.f32 %v216, %v228
        %230 = vst.msk [vmem:[%s215] sm:$0xf] %vm217, %v229
        %s231 = sand.u32 %s100, 1
        %s232 = scalar_lea.sflag [#allocation4], %s231
        %s233 = sand.u32 %s100, 1
        %s234 = smul.addr %s233, 4
        %s235 = scalar_lea.vmem [#allocation7], %s234
        // Predicated region
        $region37: #{tpu_custom_call.1} parent=27 // pred_check
          %p236 = pneg %p110
        $region38: #{tpu_custom_call.1} parent=27 // pred_check_branch
          %238 = sbr.rel (%p236) target = $region40
        $region39: #{tpu_custom_call.1} parent=27 // pred_region
          %s240 = ssub.s32 64, 64
          %241 = vsyncadd %s232, %s240
          %s242 = sadd.s32 %s27, %s26
          %s243 = smul.addr %s242, 64
          %s244 = scalar_lea.hbm %s2, %s243
          %s246 = sshll.u32 %s235, 4
          %s247 = int_to_ptr.vmem [resolvable:$true] %s246
          %249 = dma.vmem_to_hbm [thread:$0]  %s247, 64, %s244, %s232
        $region40: #{tpu_custom_call.1} parent=27 // pred_fallthru
          _
      $region28: #{tpu_custom_call.1} parent=5 // pred_fallthru
        _
      %p250 = scmp.le.s32.totalorder 2, %s17
      // Predicated region
      $region41: #{tpu_custom_call.1} parent=5 // pred_check
        %p251 = pneg %p250
      $region42: #{tpu_custom_call.1} parent=5 // pred_check_branch
        %253 = sbr.rel (%p251) target = $region44
      $region43: #{tpu_custom_call.1} parent=5 // pred_region
        %s254 = ssub.s32 %s17, 2
        // Predicated region
        $region45: #{tpu_custom_call.1} parent=43 // pred_check
          %p255 = pneg %p116
        $region46: #{tpu_custom_call.1} parent=43 // pred_check_branch
          %257 = sbr.rel (%p255) target = $region48
        $region47: #{tpu_custom_call.1} parent=43 // pred_region
          %s258 = sand.u32 %s101, 1
          %s259 = scalar_lea.sflag [#allocation4], %s258
          %s260 = sand.u32 %s101, 1
          %s261 = smul.addr %s260, 4
          %s262 = scalar_lea.vmem [#allocation7], %s261
          %263 = dma.done %s259, 64
        $region48: #{tpu_custom_call.1} parent=43 // pred_fallthru
          _
      $region44: #{tpu_custom_call.1} parent=5 // pred_fallthru
        _
    $region6: #{tpu_custom_call.1} parent=1 // loop_footer
      %s21 = sadd.s32 1, %s17
    $region7: #{tpu_custom_call.1} parent=1 // loop_footer_branch
      %16 = sbr.rel target = $region3
    $region8: #{tpu_custom_call.1} parent=1 // loop_exit
      _
    %264 = vsyncpa [#allocation3], 1
    %s265 = scalar_lea.sflag [#allocation3], 1
    %266 = vsyncpa %s265, 1
    %267 = vsyncpa [#allocation6], 1
    %s268 = scalar_lea.sflag [#allocation6], 1
    %269 = vsyncpa %s268, 1
    %270 = vsyncpa [#allocation4], 1
    %s271 = scalar_lea.sflag [#allocation4], 1
    %272 = vsyncpa %s271, 1

</llo_original>
